<compile_context>
chip_gen: v6e
topology: v6e:2x2x1
jax: 0.10.0
libtpu: 0.0.40
codegen_flags: <defaults>
</compile_context>

<pallas_src>
import functools

import jax
import jax.numpy as jnp
from jax.experimental import pallas as pl
from jax.experimental.pallas import tpu as pltpu


def _ce_kernel(p_ref, t_ref, out_ref, acc_ref, *, eps):
    j = pl.program_id(1)

    @pl.when(j == 0)
    def _():
        acc_ref[...] = jnp.zeros_like(acc_ref)

    x = p_ref[0].astype(jnp.float32)          # (C, tile_m)
    t = t_ref[0].astype(jnp.float32)          # (C, tile_m)

    # softmax over the channel axis (sublane axis 0) — original semantics
    m = jnp.max(x, axis=0, keepdims=True)
    e = jnp.exp(x - m)
    s = jnp.sum(e, axis=0, keepdims=True)
    p = e * pl.reciprocal(s, approx=False)

    # elementwise loss contribution; accumulate with pure VPU adds
    # (no per-step cross-lane reduce, no per-step scalar store)
    acc_ref[...] += t * jnp.log(p + eps)

    @pl.when(j == pl.num_programs(1) - 1)
    def _():
        # one cross-lane reduce per batch entry; broadcast the scalar into a
        # lane-dense (1, 8, 128) output block (wrapper reads [n, 0, 0]).
        total = jnp.sum(acc_ref[...])
        out_ref[...] = jnp.full(out_ref.shape, total, dtype=jnp.float32)


def _pick_tile_m(C, HW, itemsize, *, budget_bytes=20 * 1024 * 1024,
                 max_tile=8192):
    """Largest multiple of 128 dividing HW that fits the VMEM budget."""
    per_pos = C * (4 * itemsize + 4)   # 2 inputs x 2 buffers + f32 accumulator
    cap = max(128, budget_bytes // per_pos)
    cap = min(cap, max_tile, HW)
    t = (cap // 128) * 128
    while t >= 128:
        if HW % t == 0:
            return t
        t -= 128
    # Fall back to the full spatial extent (a full-extent block is allowed).
    return HW


def cross_entropy_pallas(predict, target, *, softmax=True, reduction="mean",
                         eps=1e-9):
    """predict/target: [N, C, H, W] (same shape). weight=None, ignore_index=None."""
    assert predict.shape == target.shape
    assert reduction == "mean", "kernel implements the default 'mean' reduction"
    assert softmax, "kernel implements the default softmax=True path"
    # TODO(synk): optional `weight` ([C]) / `ignore_index` / argmax paths and
    # reduction='sum'/'none' are omitted (default forward path only).
    N, C, H, W = predict.shape
    HW = H * W
    M = N * HW

    # Free contiguous view (no HBM transpose pass): NCHW -> (N, C, HW)
    p3 = predict.reshape(N, C, HW)
    t3 = target.reshape(N, C, HW)

    tile_m = _pick_tile_m(C, HW, jnp.dtype(predict.dtype).itemsize)
    grid = (N, pl.cdiv(HW, tile_m))   # HW % tile_m == 0 by construction

    kernel = functools.partial(_ce_kernel, eps=eps)

    out = pl.pallas_call(
        kernel,
        out_shape=jax.ShapeDtypeStruct((N, 8, 128), jnp.float32),
        grid_spec=pltpu.PrefetchScalarGridSpec(
            num_scalar_prefetch=0,
            grid=grid,
            in_specs=[
                pl.BlockSpec((1, C, tile_m), lambda n, j: (n, 0, j)),
                pl.BlockSpec((1, C, tile_m), lambda n, j: (n, 0, j)),
            ],
            out_specs=pl.BlockSpec((1, 8, 128), lambda n, j: (n, 0, 0)),
            scratch_shapes=[pltpu.VMEM((C, tile_m), jnp.float32)],
        ),
        compiler_params=pltpu.CompilerParams(
            dimension_semantics=("parallel", "arbitrary"),
            vmem_limit_bytes=32 * 1024 * 1024),
    )(p3, t3)

    # per-batch partial sums -> loss.sum(dim=1), *(-1), mean over N*H*W
    partials = out[:, 0, 0]
    return -jnp.sum(partials) / jnp.float32(M)


def cross_entropy_ref(predict, target, eps=1e-9):
    p = jax.nn.softmax(predict, axis=1)
    loss = target * jnp.log(p + eps)
    loss = loss.sum(axis=1)
    return (-loss).mean()


if __name__ == "__main__":
    key = jax.random.PRNGKey(0)
    k1, k2 = jax.random.split(key)
    N, C, H, W = 2, 4, 16, 16
    predict = jax.random.normal(k1, (N, C, H, W), dtype=jnp.float32)
    # soft target distribution over channels (same shape as predict)
    target = jax.nn.softmax(jax.random.normal(k2, (N, C, H, W),
                                              dtype=jnp.float32), axis=1)

    out = jax.block_until_ready(cross_entropy_pallas(predict, target))
    ref = cross_entropy_ref(predict, target)
    assert jnp.allclose(out, ref, rtol=1e-5, atol=1e-5), (out, ref)
    print("KERNEL_OK")
</pallas_src>

<mosaic_0001>
module attributes {stable_mosaic.version = 11 : i64} {
  func.func @_ce_kernel(%arg0: i32, %arg1: i32, %arg2: memref<1x4x256xf32, #tpu.memory_space<vmem>>, %arg3: memref<1x4x256xf32, #tpu.memory_space<vmem>>, %arg4: memref<1x8x128xf32, #tpu.memory_space<vmem>>, %arg5: memref<4x256xf32, #tpu.memory_space<vmem>>) attributes {dimension_semantics = [#tpu.dimension_semantics<parallel>, #tpu.dimension_semantics<arbitrary>], iteration_bounds = array<i64: 2, 1>, scalar_prefetch = 0 : i64, scratch_operands = 1 : i64, tpu.core_type = #tpu.core_type<tc>, window_params = [{transform_indices = @transform_0, window_bounds = array<i64: 1, 4, 256>}, {transform_indices = @transform_1, window_bounds = array<i64: 1, 4, 256>}, {transform_indices = @transform_2, window_bounds = array<i64: 1, 8, 128>}]} {
    %c0_i32 = arith.constant 0 : i32
    %0 = arith.cmpi eq, %arg1, %c0_i32 : i32
    %1 = arith.extui %0 : i1 to i32
    %c0_i32_0 = arith.constant 0 : i32
    %2 = arith.cmpi ne, %1, %c0_i32_0 : i32
    scf.if %2 {
      %cst_14 = arith.constant 0.000000e+00 : f32
      %27 = vector.broadcast %cst_14 : f32 to vector<4x256xf32>
      %c0_15 = arith.constant 0 : index
      %c0_16 = arith.constant 0 : index
      %28 = vector.load %arg5[%c0_15, %c0_16] : memref<4x256xf32, #tpu.memory_space<vmem>>, vector<4x256xf32>
      tpu.vector_store %arg5[%c0_15, %c0_16], %27 {strides = array<i32>} : memref<4x256xf32, #tpu.memory_space<vmem>>, vector<4x256xf32>,
    } else {
    }
    %c0 = arith.constant 0 : index
    %c0_1 = arith.constant 0 : index
    %c0_2 = arith.constant 0 : index
    %3 = vector.load %arg2[%c0, %c0_1, %c0_2] : memref<1x4x256xf32, #tpu.memory_space<vmem>>, vector<1x4x256xf32>
    %4 = vector.shape_cast %3 : vector<1x4x256xf32> to vector<4x256xf32>
    %c0_3 = arith.constant 0 : index
    %c0_4 = arith.constant 0 : index
    %c0_5 = arith.constant 0 : index
    %5 = vector.load %arg3[%c0_3, %c0_4, %c0_5] : memref<1x4x256xf32, #tpu.memory_space<vmem>>, vector<1x4x256xf32>
    %6 = vector.shape_cast %5 : vector<1x4x256xf32> to vector<4x256xf32>
    %cst = arith.constant dense<0xFF800000> : vector<256xf32>
    %7 = vector.multi_reduction <maximumf>, %4, %cst [0] : vector<4x256xf32> to vector<256xf32>
    %8 = vector.shape_cast %7 : vector<256xf32> to vector<1x256xf32>
    %9 = vector.broadcast %8 : vector<1x256xf32> to vector<4x256xf32>
    %10 = arith.subf %4, %9 : vector<4x256xf32>
    %11 = math.exp %10 : vector<4x256xf32>
    %cst_6 = arith.constant dense<0.000000e+00> : vector<256xf32>
    %12 = vector.multi_reduction <add>, %11, %cst_6 [0] : vector<4x256xf32> to vector<256xf32>
    %13 = vector.shape_cast %12 : vector<256xf32> to vector<1x256xf32>
    %14 = tpu.reciprocal %13 : vector<1x256xf32> -> vector<1x256xf32>
    %15 = vector.broadcast %14 : vector<1x256xf32> to vector<4x256xf32>
    %16 = arith.mulf %11, %15 : vector<4x256xf32>
    %c0_7 = arith.constant 0 : index
    %c0_8 = arith.constant 0 : index
    %17 = vector.load %arg5[%c0_7, %c0_8] : memref<4x256xf32, #tpu.memory_space<vmem>>, vector<4x256xf32>
    %cst_9 = arith.constant 9.99999971E-10 : f32
    %18 = vector.broadcast %cst_9 : f32 to vector<4x256xf32>
    %19 = arith.addf %16, %18 : vector<4x256xf32>
    %20 = math.log %19 : vector<4x256xf32>
    %21 = arith.mulf %6, %20 : vector<4x256xf32>
    %22 = arith.addf %17, %21 : vector<4x256xf32>
    %c0_10 = arith.constant 0 : index
    %c0_11 = arith.constant 0 : index
    %23 = vector.load %arg5[%c0_10, %c0_11] : memref<4x256xf32, #tpu.memory_space<vmem>>, vector<4x256xf32>
    tpu.vector_store %arg5[%c0_10, %c0_11], %22 {strides = array<i32>} : memref<4x256xf32, #tpu.memory_space<vmem>>, vector<4x256xf32>,
    %c0_i32_12 = arith.constant 0 : i32
    %24 = arith.cmpi eq, %arg1, %c0_i32_12 : i32
    %25 = arith.extui %24 : i1 to i32
    %c0_i32_13 = arith.constant 0 : i32
    %26 = arith.cmpi ne, %25, %c0_i32_13 : i32
    scf.if %26 {
      %c0_14 = arith.constant 0 : index
      %c0_15 = arith.constant 0 : index
      %27 = vector.load %arg5[%c0_14, %c0_15] : memref<4x256xf32, #tpu.memory_space<vmem>>, vector<4x256xf32>
      %28 = vector.shape_cast %27 : vector<4x256xf32> to vector<1x4x256xf32>
      %cst_16 = arith.constant dense<0.000000e+00> : vector<1xf32>
      %29 = vector.multi_reduction <add>, %28, %cst_16 [1, 2] : vector<1x4x256xf32> to vector<1xf32>
      %30 = vector.shape_cast %29 : vector<1xf32> to vector<1x1x1xf32>
      %31 = vector.extract %30[0, 0, 0] : f32 from vector<1x1x1xf32>
      %32 = vector.broadcast %31 : f32 to vector<1x8x128xf32>
      %c0_17 = arith.constant 0 : index
      %c0_18 = arith.constant 0 : index
      %c0_19 = arith.constant 0 : index
      %33 = vector.load %arg4[%c0_17, %c0_18, %c0_19] : memref<1x8x128xf32, #tpu.memory_space<vmem>>, vector<1x8x128xf32>
      tpu.vector_store %arg4[%c0_17, %c0_18, %c0_19], %32 {strides = array<i32>} : memref<1x8x128xf32, #tpu.memory_space<vmem>>, vector<1x8x128xf32>,
    } else {
    }
    return
  }
  func.func @transform_0(%arg0: i32, %arg1: i32) -> (i32, i32, i32) {
    %c0_i32 = arith.constant 0 : i32
    %c0_i32_0 = arith.constant 0 : i32
    return %arg0, %c0_i32, %arg1 : i32, i32, i32
  }
  func.func @transform_1(%arg0: i32, %arg1: i32) -> (i32, i32, i32) {
    %c0_i32 = arith.constant 0 : i32
    %c0_i32_0 = arith.constant 0 : i32
    return %arg0, %c0_i32, %arg1 : i32, i32, i32
  }
  func.func @transform_2(%arg0: i32, %arg1: i32) -> (i32, i32, i32) {
    %c0_i32 = arith.constant 0 : i32
    %c0_i32_0 = arith.constant 0 : i32
    %c0_i32_1 = arith.constant 0 : i32
    return %arg0, %c0_i32, %c0_i32_0 : i32, i32, i32
  }
}

</mosaic_0001>

<llo_original>
// kernel: tpu_custom_call.1
$region0: #{tpu_custom_call.1}
  #allocation0 [shape = 'u32[]', space=smem, size = 0x4, offset = 0x4, fixed_abs, tag = 'smem constant byte address 0x4 - core index']
  #allocation1 [shape = 'u32[144,128]{1,0:T(1,128)}', space=vmem, size = 0x12000, scoped, tag = 'internal scratch']
  #allocation2 [shape = 'f32[4,256]{1,0:T(4,128)}', space=vmem, size = 0x1000, scoped, tag = 'scratch operand']
  %s0 = inlined_call_operand.hbm [shape: f32[2,4,256], index: 0, kind: input, shape index: {}]
  %s1 = inlined_call_operand.hbm [shape: f32[2,4,256], index: 1, kind: input, shape index: {}]
  %s2 = inlined_call_operand.hbm [shape: f32[2,8,128], index: 2, kind: output, shape index: {}]
  %s3 = sld [smem:[#allocation0]]
  $region57: #{tpu_custom_call.1} parent=0
    _
  %s5 = ssub.s32 1, %s3
  %s6 = scalar_select 0, %s5, %s3
  $region1: #{tpu_custom_call.1} parent=0
    #allocation3 [shape = 'u8[8192]{0}', space=vmem, size = 0x2000, scoped, tag = 'input window, operand 0']
    #allocation4 [shape = 's32[2]{0}', space=sflag, size = 0x8, scoped, tag = 'scoped memory for tpu_custom_call.1']
    #allocation5 [shape = 's32[2]{0}', space=sflag, size = 0x8, scoped, tag = 'scoped memory for tpu_custom_call.1']
    #allocation6 [shape = 'u8[8192]{0}', space=vmem, size = 0x2000, scoped, tag = 'input window, operand 1']
    #allocation7 [shape = 's32[2]{0}', space=sflag, size = 0x8, scoped, tag = 'scoped memory for tpu_custom_call.1']
    #allocation8 [shape = 'u8[8192]{0}', space=vmem, size = 0x2000, scoped, tag = 'output window, operand 0']
    %7 = vsyncpa [#allocation4], 0
    %s8 = scalar_lea.sflag [#allocation4], 1
    %9 = vsyncpa %s8, 0
    %10 = vsyncpa [#allocation7], 0
    %s11 = scalar_lea.sflag [#allocation7], 1
    %12 = vsyncpa %s11, 0
    %13 = vsyncpa [#allocation5], 0
    %s14 = scalar_lea.sflag [#allocation5], 1
    %15 = vsyncpa %s14, 0
    loop: start=0, step=1, limit=4
    $region2: #{tpu_custom_call.1} parent=1 // loop_pre_header
      _
    $region3: #{tpu_custom_call.1} parent=1 // loop_header
      %s17 = sphi 0, %s21
      %p18 = scmp.ge.s32.totalorder %s17, 4
      %s24 = sphi 0, %s36
      %s25 = sphi 0, %s32
      %s26 = sphi 0, %s24
      %s27 = sphi 0, %s25
      %s28 = sphi 0, %s26
      %s29 = sphi 0, %s27
      %s41 = sphi 0, %s43
      %s44 = sphi 0, %s41
      %s45 = sphi 0, %s44
      %s61 = sphi 0, %s45
      %s69 = sphi 0, %s71
      %s72 = sphi 0, %s69
      %s73 = sphi 0, %s72
      %s89 = sphi 0, %s73
      %s95 = sphi 0, %s97
      %s98 = sphi 0, %s95
      %s99 = sphi 0, %s98
      %s115 = sphi 0, %s99
    $region4: #{tpu_custom_call.1} parent=1 // loop_header_branch
      %20 = sbr.rel (%p18) target = $region8
    $region5: #{tpu_custom_call.1} parent=1 // loop_body
      %s22 = ssub.s32 %s17, 1
      %s23 = ssub.s32 %s17, 2
      %s30 = sadd.s32 1, %s25
      %p31 = scmp.ge.s32.totalorder %s30, 1
      %s32 = scalar_select %p31, 0, %s30
      %s33 = sadd.s32 1, %s24
      %s34 = scalar_select %p31, %s33, %s24
      %p35 = scmp.ge.s32.totalorder %s34, 2
      %s36 = scalar_select %p35, 0, %s34
      %s37 = ssub.s32 %s24, %s36
      %s38 = ssub.s32 %s25, %s32
      %s39 = sor.u32 %s37, %s38
      %p40 = scmp.eq.s32.totalorder %s39, 0
      %s42 = sadd.s32 %s41, 1
      %s43 = scalar_select %p40, %s41, %s42
      %p46 = pneg %p40
      %p47 = scmp.eq.s32.totalorder %s17, 1
      %p48 = por %p46, %p47
      %p49 = scmp.ne.s32.totalorder %s41, %s44
      %p50 = scmp.eq.s32.totalorder %s17, 0
      %p51 = por %p49, %p50
      %p52 = scmp.ne.s32.totalorder %s41, %s44
      %p53 = scmp.eq.s32.totalorder %s22, 1
      %p54 = por %p52, %p53
      %p55 = scmp.ne.s32.totalorder %s44, %s45
      %p56 = scmp.eq.s32.totalorder %s22, 0
      %p57 = por %p55, %p56
      %p58 = scmp.ne.s32.totalorder %s44, %s45
      %p59 = scmp.eq.s32.totalorder %s23, 1
      %p60 = por %p58, %p59
      %p62 = scmp.ne.s32.totalorder %s45, %s61
      %p63 = scmp.eq.s32.totalorder %s23, 0
      %p64 = por %p62, %p63
      %s65 = ssub.s32 %s24, %s36
      %s66 = ssub.s32 %s25, %s32
      %s67 = sor.u32 %s65, %s66
      %p68 = scmp.eq.s32.totalorder %s67, 0
      %s70 = sadd.s32 %s69, 1
      %s71 = scalar_select %p68, %s69, %s70
      %p74 = pneg %p68
      %p75 = scmp.eq.s32.totalorder %s17, 1
      %p76 = por %p74, %p75
      %p77 = scmp.ne.s32.totalorder %s69, %s72
      %p78 = scmp.eq.s32.totalorder %s17, 0
      %p79 = por %p77, %p78
      %p80 = scmp.ne.s32.totalorder %s69, %s72
      %p81 = scmp.eq.s32.totalorder %s22, 1
      %p82 = por %p80, %p81
      %p83 = scmp.ne.s32.totalorder %s72, %s73
      %p84 = scmp.eq.s32.totalorder %s22, 0
      %p85 = por %p83, %p84
      %p86 = scmp.ne.s32.totalorder %s72, %s73
      %p87 = scmp.eq.s32.totalorder %s23, 1
      %p88 = por %p86, %p87
      %p90 = scmp.ne.s32.totalorder %s73, %s89
      %p91 = scmp.eq.s32.totalorder %s23, 0
      %p92 = por %p90, %p91
      %s93 = ssub.s32 %s24, %s36
      %p94 = scmp.eq.s32.totalorder %s93, 0
      %s96 = sadd.s32 %s95, 1
      %s97 = scalar_select %p94, %s95, %s96
      %p100 = pneg %p94
      %p101 = scmp.eq.s32.totalorder %s17, 1
      %p102 = por %p100, %p101
      %p103 = scmp.ne.s32.totalorder %s95, %s98
      %p104 = scmp.eq.s32.totalorder %s17, 0
      %p105 = por %p103, %p104
      %p106 = scmp.ne.s32.totalorder %s95, %s98
      %p107 = scmp.eq.s32.totalorder %s22, 1
      %p108 = por %p106, %p107
      %p109 = scmp.ne.s32.totalorder %s98, %s99
      %p110 = scmp.eq.s32.totalorder %s22, 0
      %p111 = por %p109, %p110
      %p112 = scmp.ne.s32.totalorder %s98, %s99
      %p113 = scmp.eq.s32.totalorder %s23, 1
      %p114 = por %p112, %p113
      %p116 = scmp.ne.s32.totalorder %s99, %s115
      %p117 = scmp.eq.s32.totalorder %s23, 0
      %p118 = por %p116, %p117
      %p119 = scmp.le.s32.totalorder 1, %s17
      %p120 = scmp.lt.s32.totalorder %s17, 3
      %p121 = pnand %p119, %p120
      %p122 = pneg %p121
      // Predicated region
      $region9: #{tpu_custom_call.1} parent=5 // pred_check
        _
      $region10: #{tpu_custom_call.1} parent=5 // pred_check_branch
        %124 = sbr.rel (%p121) target = $region12
      $region11: #{tpu_custom_call.1} parent=5 // pred_region
        %s125 = ssub.s32 %s17, 1
      $region12: #{tpu_custom_call.1} parent=5 // pred_fallthru
        _
      %p126 = scmp.lt.s32.totalorder %s17, 2
      // Predicated region
      $region13: #{tpu_custom_call.1} parent=5 // pred_check
        %p127 = pneg %p126
      $region14: #{tpu_custom_call.1} parent=5 // pred_check_branch
        %129 = sbr.rel (%p127) target = $region16
      $region15: #{tpu_custom_call.1} parent=5 // pred_region
        // Predicated region
        $region17: #{tpu_custom_call.1} parent=15 // pred_check
          %p130 = pneg %p51
        $region18: #{tpu_custom_call.1} parent=15 // pred_check_branch
          %132 = sbr.rel (%p130) target = $region20
        $region19: #{tpu_custom_call.1} parent=15 // pred_region
          %s133 = sand.u32 %s41, 1
          %s134 = scalar_lea.sflag [#allocation4], %s133
          %s135 = sand.u32 %s41, 1
          %s136 = smul.addr %s135, 8
          %s137 = scalar_lea.vmem [#allocation3], %s136
          %s138 = smul.u32 2, %s25
          %s140 = ssub.s32 128, 128
          %141 = vsyncadd %s134, %s140
          %s142 = smul.addr %s24, 2
          %s143 = sadd.s32 %s138, %s142
          %s144 = smul.addr %s143, 64
          %s145 = scalar_lea.hbm %s0, %s144
          %s147 = sshll.u32 %s137, 4
          %s148 = int_to_ptr.vmem [resolvable:$true] %s147
          %150 = dma.hbm_to_vmem [thread:$0]  %s145, 128, %s148, %s134
        $region20: #{tpu_custom_call.1} parent=15 // pred_fallthru
          _
        // Predicated region
        $region21: #{tpu_custom_call.1} parent=15 // pred_check
          %p151 = pneg %p79
        $region22: #{tpu_custom_call.1} parent=15 // pred_check_branch
          %153 = sbr.rel (%p151) target = $region24
        $region23: #{tpu_custom_call.1} parent=15 // pred_region
          %s154 = sand.u32 %s69, 1
          %s155 = scalar_lea.sflag [#allocation7], %s154
          %s156 = sand.u32 %s69, 1
          %s157 = smul.addr %s156, 8
          %s158 = scalar_lea.vmem [#allocation6], %s157
          %s159 = smul.u32 2, %s25
          %s161 = ssub.s32 128, 128
          %162 = vsyncadd %s155, %s161
          %s163 = smul.addr %s24, 2
          %s164 = sadd.s32 %s159, %s163
          %s165 = smul.addr %s164, 64
          %s166 = scalar_lea.hbm %s1, %s165
          %s168 = sshll.u32 %s158, 4
          %s169 = int_to_ptr.vmem [resolvable:$true] %s168
          %171 = dma.hbm_to_vmem [thread:$0]  %s166, 128, %s169, %s155
        $region24: #{tpu_custom_call.1} parent=15 // pred_fallthru
          _
      $region16: #{tpu_custom_call.1} parent=5 // pred_fallthru
        _
      %p172 = scmp.le.s32.totalorder 1, %s17
      %p173 = scmp.lt.s32.totalorder %s17, 3
      %p174 = pnand %p172, %p173
      %p175 = pneg %p174
      // Predicated region
      $region25: #{tpu_custom_call.1} parent=5 // pred_check
        _
      $region26: #{tpu_custom_call.1} parent=5 // pred_check_branch
        %177 = sbr.rel (%p174) target = $region28
      $region27: #{tpu_custom_call.1} parent=5 // pred_region
        %s178 = ssub.s32 %s17, 1
        %s179 = sand.u32 %s44, 1
        %s180 = scalar_lea.sflag [#allocation4], %s179
        %s181 = sand.u32 %s44, 1
        %s182 = smul.addr %s181, 8
        %s183 = scalar_lea.vmem [#allocation3], %s182
        // Predicated region
        $region29: #{tpu_custom_call.1} parent=27 // pred_check
          %p184 = pneg %p57
        $region30: #{tpu_custom_call.1} parent=27 // pred_check_branch
          %186 = sbr.rel (%p184) target = $region32
        $region31: #{tpu_custom_call.1} parent=27 // pred_region
          %187 = dma.done %s180, 128
        $region32: #{tpu_custom_call.1} parent=27 // pred_fallthru
          _
        %s188 = sand.u32 %s72, 1
        %s189 = scalar_lea.sflag [#allocation7], %s188
        %s190 = sand.u32 %s72, 1
        %s191 = smul.addr %s190, 8
        %s192 = scalar_lea.vmem [#allocation6], %s191
        // Predicated region
        $region33: #{tpu_custom_call.1} parent=27 // pred_check
          %p193 = pneg %p85
        $region34: #{tpu_custom_call.1} parent=27 // pred_check_branch
          %195 = sbr.rel (%p193) target = $region36
        $region35: #{tpu_custom_call.1} parent=27 // pred_region
          %196 = dma.done %s189, 128
        $region36: #{tpu_custom_call.1} parent=27 // pred_fallthru
          _
        %s197 = sand.u32 %s44, 1
        %s198 = scalar_lea.sflag [#allocation4], %s197
        %s199 = sand.u32 %s44, 1
        %s200 = smul.addr %s199, 8
        %s201 = scalar_lea.vmem [#allocation3], %s200
        %p202 = pneg %p57
        %p203 = pneg %p54
        %s204 = sand.u32 %s72, 1
        %s205 = scalar_lea.sflag [#allocation7], %s204
        %s206 = sand.u32 %s72, 1
        %s207 = smul.addr %s206, 8
        %s208 = scalar_lea.vmem [#allocation6], %s207
        %p209 = pneg %p85
        %p210 = pneg %p82
        %p211 = pneg %p111
        %p212 = pneg %p108
        %s213 = sand.u32 %s98, 1
        %s214 = scalar_lea.sflag [#allocation5], %s213
        %s215 = sand.u32 %s98, 1
        %s216 = smul.addr %s215, 8
        %s217 = scalar_lea.vmem [#allocation8], %s216
        %s218 = smul.u32 2, %s27
        %s219 = smul.u32 2, %s27
        %p220 = scmp.eq.s32.totalorder %s27, 0
        // Predicated region
        $region37: #{tpu_custom_call.1} parent=27 // pred_check
          %p221 = pneg %p220
        $region38: #{tpu_custom_call.1} parent=27 // pred_check_branch
          %223 = sbr.rel (%p221) target = $region40
        $region39: #{tpu_custom_call.1} parent=27 // pred_region
          %224 = vst [vmem:[#allocation2] sm:$0xff] 0.0
        $region40: #{tpu_custom_call.1} parent=27 // pred_fallthru
          _
        %v225 = vld [vmem:[%s183] sm:$0xff]
        %v226 = vld [vmem:[%s192] sm:$0xff]
        %v228 = vcombine.high %v225, %v225
        %vm230 = vcmask 1043456
        %v231 = vsel %vm230, %v225, -inf
        %v232 = vrot.slane %v231, 4
        %v233 = vmax.f32 %v231, %v232
        %v234 = vrot.slane %v233, 2
        %v235 = vmax.f32 %v233, %v234
        %v236 = vrot.slane %v235, 1
        %v237 = vmax.f32 %v235, %v236
        %v238 = vsel %vm230, %v228, -inf
        %v239 = vrot.slane %v238, 4
        %v240 = vmax.f32 %v238, %v239
        %v241 = vrot.slane %v240, 2
        %v242 = vmax.f32 %v240, %v241
        %v243 = vrot.slane %v242, 1
        %v244 = vmax.f32 %v242, %v243
        %v247 = vcombine.low %v237, %v244
        %v249 = vsub.f32 %v225, %v247
        %v250 = vmul.f32 %v249, 1.442695
        %v251 = vpow.pop %v250
        %v253 = vcombine.high %v251, %v251
        %v255 = vsel %vm230, %v251, 0.0
        %v256 = vrot.slane %v255, 4
        %v257 = vadd.f32 %v255, %v256
        %v258 = vrot.slane %v257, 2
        %v259 = vadd.f32 %v257, %v258
        %v260 = vrot.slane %v259, 1
        %v261 = vadd.f32 %v259, %v260
        %v262 = vsel %vm230, %v253, 0.0
        %v263 = vrot.slane %v262, 4
        %v264 = vadd.f32 %v262, %v263
        %v265 = vrot.slane %v264, 2
        %v266 = vadd.f32 %v264, %v265
        %v267 = vrot.slane %v266, 1
        %v268 = vadd.f32 %v266, %v267
        %v269 = vrcp.pop %v261
        %v270 = vrcp.pop %v268
        %v273 = vcombine.low %v269, %v270
        %v275 = vmul.f32 %v251, %v273
        %v276 = vld [vmem:[#allocation2] sm:$0xff]
        %v277 = vadd.f32 %v275, 1e-09
        %v278 = vlog2.pop %v277
        %v279 = vmul.f32 %v278, 0.6931472
        %v280 = vmul.f32 %v226, %v279
        %v281 = vadd.f32 %v276, %v280
        %282 = vst [vmem:[#allocation2] sm:$0xff] %v281
        // Predicated region
        $region41: #{tpu_custom_call.1} parent=27 // pred_check
          %p283 = pneg %p220
        $region42: #{tpu_custom_call.1} parent=27 // pred_check_branch
          %285 = sbr.rel (%p283) target = $region44
        $region43: #{tpu_custom_call.1} parent=27 // pred_region
          %v286 = vld [vmem:[#allocation2] sm:$0xff]
          %v288 = vcombine.high %v286, %v286
          %v290 = vsel %vm230, %v286, 0.0
          %v291 = vsel %vm230, %v288, 0.0
          %v292 = vadd.f32 %v290, %v291
          %293 = vadd.xlane.f32.xlu0 %v292
          %v294 = vpop.xlane.xlu0 %293
          %v295 = vrot.slane %v294, 4
          %v296 = vadd.f32 %v294, %v295
          %v297 = vrot.slane %v296, 2
          %v298 = vadd.f32 %v296, %v297
          %v299 = vrot.slane %v298, 1
          %v300 = vadd.f32 %v298, %v299
          %s301 = vtos %v300
          %v302 = vstv %s301
          %303 = vst [vmem:[%s217] sm:$0xff] %v302
        $region44: #{tpu_custom_call.1} parent=27 // pred_fallthru
          _
        %s304 = sand.u32 %s98, 1
        %s305 = scalar_lea.sflag [#allocation5], %s304
        %s306 = sand.u32 %s98, 1
        %s307 = smul.addr %s306, 8
        %s308 = scalar_lea.vmem [#allocation8], %s307
        // Predicated region
        $region45: #{tpu_custom_call.1} parent=27 // pred_check
          %p309 = pneg %p108
        $region46: #{tpu_custom_call.1} parent=27 // pred_check_branch
          %311 = sbr.rel (%p309) target = $region48
        $region47: #{tpu_custom_call.1} parent=27 // pred_region
          %s313 = ssub.s32 128, 128
          %314 = vsyncadd %s305, %s313
          %s315 = smul.addr %s26, 128
          %s316 = scalar_lea.hbm %s2, %s315
          %s318 = sshll.u32 %s308, 4
          %s319 = int_to_ptr.vmem [resolvable:$true] %s318
          %321 = dma.vmem_to_hbm [thread:$0]  %s319, 128, %s316, %s305
        $region48: #{tpu_custom_call.1} parent=27 // pred_fallthru
          _
      $region28: #{tpu_custom_call.1} parent=5 // pred_fallthru
        _
      %p322 = scmp.le.s32.totalorder 2, %s17
      // Predicated region
      $region49: #{tpu_custom_call.1} parent=5 // pred_check
        %p323 = pneg %p322
      $region50: #{tpu_custom_call.1} parent=5 // pred_check_branch
        %325 = sbr.rel (%p323) target = $region52
      $region51: #{tpu_custom_call.1} parent=5 // pred_region
        %s326 = ssub.s32 %s17, 2
        // Predicated region
        $region53: #{tpu_custom_call.1} parent=51 // pred_check
          %p327 = pneg %p114
        $region54: #{tpu_custom_call.1} parent=51 // pred_check_branch
          %329 = sbr.rel (%p327) target = $region56
        $region55: #{tpu_custom_call.1} parent=51 // pred_region
          %s330 = sand.u32 %s99, 1
          %s331 = scalar_lea.sflag [#allocation5], %s330
          %s332 = sand.u32 %s99, 1
          %s333 = smul.addr %s332, 8
          %s334 = scalar_lea.vmem [#allocation8], %s333
          %335 = dma.done %s331, 128
        $region56: #{tpu_custom_call.1} parent=51 // pred_fallthru
          _
      $region52: #{tpu_custom_call.1} parent=5 // pred_fallthru
        _
    $region6: #{tpu_custom_call.1} parent=1 // loop_footer
      %s21 = sadd.s32 1, %s17
    $region7: #{tpu_custom_call.1} parent=1 // loop_footer_branch
      %16 = sbr.rel target = $region3
    $region8: #{tpu_custom_call.1} parent=1 // loop_exit
      _
    %336 = vsyncpa [#allocation4], 1
    %s337 = scalar_lea.sflag [#allocation4], 1
    %338 = vsyncpa %s337, 1
    %339 = vsyncpa [#allocation7], 1
    %s340 = scalar_lea.sflag [#allocation7], 1
    %341 = vsyncpa %s340, 1
    %342 = vsyncpa [#allocation5], 1
    %s343 = scalar_lea.sflag [#allocation5], 1
    %344 = vsyncpa %s343, 1

</llo_original>
